<compile_context>
chip_gen: v7x
topology: tpu7x:2x2x1
jax: 0.10.0
libtpu: 0.0.40
codegen_flags: <defaults>
</compile_context>

<pallas_src>
import functools

import jax
import jax.numpy as jnp
import numpy as np
from jax import lax
from jax.experimental import pallas as pl
from jax.experimental.pallas import tpu as pltpu


# ----------------------------------------------------------------------------
# Pallas kernel: bidirectional LSTM recurrence, time-major, chunked time axis.
# ----------------------------------------------------------------------------
def _bilstm_recurrence_kernel(gx_ref, whh_ref,             # inputs
                              out_ref, hN_ref, cN_ref,     # outputs
                              *, hidden, chunk):
    """One grid step = one (direction, time-chunk) tile.

    gx_ref : (chunk, B, 4H)  precomputed x @ W_ih^T + (b_ih + b_hh) for tile
    whh_ref: (H, 4H)         recurrent weight (transposed) for this direction
    out_ref: (chunk, B, H)   per-timestep hidden states for this tile
    hN_ref : (B, H)          VMEM-resident accumulator: carries h across chunks
    cN_ref : (B, H)          VMEM-resident accumulator: carries c across chunks
    """
    d = pl.program_id(0)     # 0 = forward, 1 = backward
    c = pl.program_id(1)     # chunk index along the sequential time axis

    @pl.when(c == 0)
    def _():
        hN_ref[...] = jnp.zeros_like(hN_ref)
        cN_ref[...] = jnp.zeros_like(cN_ref)

    whh = whh_ref[...]       # (H, 4H) -- hoisted out of the time loop

    def step(s, carry):
        h, c_cell = carry
        # forward walks 0..chunk-1; backward walks chunk-1..0.  (Global time is
        # also reversed at chunk granularity via the BlockSpec index_maps.)
        t = (1 - d) * s + d * (chunk - 1 - s)
        gates = gx_ref[t] + jnp.dot(h, whh, preferred_element_type=jnp.float32)
        # PyTorch gate order: input, forget, cell, output
        i = jax.nn.sigmoid(gates[:, 0 * hidden:1 * hidden])
        f = jax.nn.sigmoid(gates[:, 1 * hidden:2 * hidden])
        g = jnp.tanh(gates[:, 2 * hidden:3 * hidden])
        o = jax.nn.sigmoid(gates[:, 3 * hidden:4 * hidden])
        c_new = f * c_cell + i * g
        h_new = o * jnp.tanh(c_new)
        out_ref[t] = h_new
        return h_new, c_new

    h_fin, c_fin = lax.fori_loop(0, chunk, step, (hN_ref[...], cN_ref[...]))
    hN_ref[...] = h_fin
    cN_ref[...] = c_fin


def _pick_time_chunk(seq_len, cap=128):
    """Largest divisor of seq_len not exceeding `cap`."""
    t = min(seq_len, cap)
    while seq_len % t != 0:
        t -= 1
    return t


def bidirectional_lstm(gates_x, whhT, hidden, time_chunk=None):
    """Run the recurrence for both directions in one pallas_call.

    gates_x: (2, S, B, 4H) float32 -- precomputed input projections (+ bias)
    whhT   : (2, H, 4H)    float32 -- per-direction recurrent weights (W_hh^T)
    Returns (out, h_n, c_n): (2, S, B, H), (2, B, H), (2, B, H).
    """
    _, S, B, _ = gates_x.shape
    T = time_chunk if time_chunk is not None else _pick_time_chunk(S)
    nchunks = S // T

    def rev_chunk(d, c):
        # forward direction reads chunk c; backward reads chunk nchunks-1-c
        return (1 - d) * c + d * (nchunks - 1 - c)

    kernel = functools.partial(_bilstm_recurrence_kernel,
                               hidden=hidden, chunk=T)

    # Rough VMEM budget (double-buffered blocks + resident state), with a floor
    # at the default scoped limit and a cap at v7x physical VMEM.
    block_bytes = 4 * (T * B * 4 * hidden + hidden * 4 * hidden
                       + T * B * hidden + 2 * B * hidden)
    vmem_limit = int(min(max(4 * block_bytes, 32 * 1024 * 1024),
                         64 * 1024 * 1024))

    out, h_n, c_n = pl.pallas_call(
        kernel,
        out_shape=(jax.ShapeDtypeStruct((2, S, B, hidden), jnp.float32),
                   jax.ShapeDtypeStruct((2, B, hidden), jnp.float32),
                   jax.ShapeDtypeStruct((2, B, hidden), jnp.float32)),
        grid_spec=pltpu.PrefetchScalarGridSpec(
            num_scalar_prefetch=0,
            grid=(2, nchunks),
            in_specs=[
                pl.BlockSpec((None, T, B, 4 * hidden),
                             lambda d, c: (d, rev_chunk(d, c), 0, 0)),
                pl.BlockSpec((None, hidden, 4 * hidden),
                             lambda d, c: (d, 0, 0)),
            ],
            out_specs=(
                pl.BlockSpec((None, T, B, hidden),
                             lambda d, c: (d, rev_chunk(d, c), 0, 0)),
                pl.BlockSpec((None, B, hidden), lambda d, c: (d, 0, 0)),
                pl.BlockSpec((None, B, hidden), lambda d, c: (d, 0, 0)),
            ),
        ),
        compiler_params=pltpu.CompilerParams(
            dimension_semantics=("parallel", "arbitrary"),
            vmem_limit_bytes=vmem_limit),
    )(gates_x, whhT)
    return out, h_n, c_n


# ----------------------------------------------------------------------------
# Encoder forward (embedding + hoisted input projection + recurrence kernel)
# ----------------------------------------------------------------------------
def encoder_forward(params, x_ids, decoder_embedding=None, time_chunk=None):
    """x_ids: (B, S) int32 token ids.

    Returns:
      output: (B, S, 2*H)
      (h_n, c_n): each (2, B, H)   [dir 0 = forward, dir 1 = backward]
    """
    hidden = params["hidden_size"]
    table = params["embedding"] if decoder_embedding is None else decoder_embedding

    embedded = jnp.take(table, x_ids, axis=0).astype(jnp.float32)   # (B, S, E)
    x_tm = jnp.transpose(embedded, (1, 0, 2))                       # (S, B, E)

    # Per-direction weights stacked: 0 = forward, 1 = backward.
    w_ih = jnp.stack([params["w_ih_f"], params["w_ih_b"]]).astype(jnp.float32)      # (2,4H,E)
    whhT = jnp.stack([params["w_hh_f"].T, params["w_hh_b"].T]).astype(jnp.float32)  # (2,H,4H)
    bias = jnp.stack([params["b_ih_f"] + params["b_hh_f"],
                      params["b_ih_b"] + params["b_hh_b"]]).astype(jnp.float32)     # (2,4H)

    # Hoisted input projection: one large MXU-friendly GEMM per direction,
    # bias folded in, off the serial critical path.
    gates_x = jnp.einsum("sbe,dge->dsbg", x_tm, w_ih,
                         preferred_element_type=jnp.float32,
                         precision="highest")
    gates_x = gates_x + bias[:, None, None, :]                      # (2, S, B, 4H)

    out, h_n, c_n = bidirectional_lstm(gates_x, whhT, hidden, time_chunk)

    output = jnp.concatenate([out[0], out[1]], axis=-1)             # (S, B, 2H)
    output = jnp.transpose(output, (1, 0, 2))                       # (B, S, 2H)
    return output, (h_n, c_n)


# ----------------------------------------------------------------------------
# Pure-JAX reference (lax.scan) for correctness check
# ----------------------------------------------------------------------------
def _lstm_dir_ref(x_tm, w_ih, w_hh, b_ih, b_hh, hidden):
    B = x_tm.shape[1]

    def step(carry, x_t):
        h, c = carry
        gates = (jnp.dot(x_t, w_ih.T, precision="highest") + b_ih
                 + jnp.dot(h, w_hh.T, precision="highest") + b_hh)
        i, f, g, o = jnp.split(gates, 4, axis=-1)
        i = jax.nn.sigmoid(i)
        f = jax.nn.sigmoid(f)
        g = jnp.tanh(g)
        o = jax.nn.sigmoid(o)
        c = f * c + i * g
        h = o * jnp.tanh(c)
        return (h, c), h

    init = (jnp.zeros((B, hidden), jnp.float32),
            jnp.zeros((B, hidden), jnp.float32))
    (h_n, c_n), out = jax.lax.scan(step, init, x_tm)
    return out, h_n, c_n


def encoder_forward_ref(params, x_ids):
    hidden = params["hidden_size"]
    embedded = jnp.take(params["embedding"], x_ids, axis=0)
    x_tm = jnp.transpose(embedded, (1, 0, 2)).astype(jnp.float32)
    out_f, h_f, c_f = _lstm_dir_ref(
        x_tm, params["w_ih_f"], params["w_hh_f"],
        params["b_ih_f"], params["b_hh_f"], hidden)
    x_rev = jnp.flip(x_tm, axis=0)
    out_b_rev, h_b, c_b = _lstm_dir_ref(
        x_rev, params["w_ih_b"], params["w_hh_b"],
        params["b_ih_b"], params["b_hh_b"], hidden)
    out_b = jnp.flip(out_b_rev, axis=0)
    output = jnp.transpose(jnp.concatenate([out_f, out_b], axis=-1), (1, 0, 2))
    return output, (jnp.stack([h_f, h_b], 0), jnp.stack([c_f, c_b], 0))


# ----------------------------------------------------------------------------
# Deterministic parameter init (matches PyTorch __init__ shapes)
# ----------------------------------------------------------------------------
def init_params(key, vocab_size, embed_size, hidden_size):
    keys = jax.random.split(key, 9)
    k = 1.0 / np.sqrt(hidden_size)

    def unif(rng, shape):
        return jax.random.uniform(rng, shape, jnp.float32, -k, k)

    return {
        "hidden_size": hidden_size,
        # nn.Embedding default init: N(0, 1)
        "embedding": jax.random.normal(keys[0], (vocab_size, embed_size),
                                       jnp.float32),
        # nn.LSTM(bidirectional=True) params, uniform(-1/sqrt(H), 1/sqrt(H))
        "w_ih_f": unif(keys[1], (4 * hidden_size, embed_size)),
        "w_hh_f": unif(keys[2], (4 * hidden_size, hidden_size)),
        "b_ih_f": unif(keys[3], (4 * hidden_size,)),
        "b_hh_f": unif(keys[4], (4 * hidden_size,)),
        "w_ih_b": unif(keys[5], (4 * hidden_size, embed_size)),
        "w_hh_b": unif(keys[6], (4 * hidden_size, hidden_size)),
        "b_ih_b": unif(keys[7], (4 * hidden_size,)),
        "b_hh_b": unif(keys[8], (4 * hidden_size,)),
    }


if __name__ == "__main__":
    vocab_size, embed_size, hidden_size = 50, 32, 32
    batch, seq_len = 2, 8

    root = jax.random.PRNGKey(0)
    k_params, k_ids = jax.random.split(root)
    params = init_params(k_params, vocab_size, embed_size, hidden_size)
    x_ids = jax.random.randint(k_ids, (batch, seq_len), 0, vocab_size,
                               dtype=jnp.int32)

    output, (h_n, c_n) = encoder_forward(params, x_ids)
    jax.block_until_ready((output, h_n, c_n))

    # correctness check vs pure-JAX reference
    out_ref, (h_ref, c_ref) = encoder_forward_ref(params, x_ids)
    assert output.shape == (batch, seq_len, 2 * hidden_size)
    assert h_n.shape == (2, batch, hidden_size)
    assert c_n.shape == (2, batch, hidden_size)
    np.testing.assert_allclose(np.asarray(output), np.asarray(out_ref),
                               rtol=1e-5, atol=2e-5)
    np.testing.assert_allclose(np.asarray(h_n), np.asarray(h_ref),
                               rtol=1e-5, atol=2e-5)
    np.testing.assert_allclose(np.asarray(c_n), np.asarray(c_ref),
                               rtol=1e-5, atol=2e-5)

    print("KERNEL_OK")
</pallas_src>

<mosaic_0001>
module attributes {stable_mosaic.version = 11 : i64} {
  func.func @_bilstm_recurrence_kernel(%arg0: i32, %arg1: i32, %arg2: memref<1x8x2x128xf32, #tpu.memory_space<vmem>>, %arg3: memref<1x32x128xf32, #tpu.memory_space<vmem>>, %arg4: memref<1x8x2x32xf32, #tpu.memory_space<vmem>>, %arg5: memref<1x2x32xf32, #tpu.memory_space<vmem>>, %arg6: memref<1x2x32xf32, #tpu.memory_space<vmem>>) attributes {dimension_semantics = [#tpu.dimension_semantics<parallel>, #tpu.dimension_semantics<arbitrary>], iteration_bounds = array<i64: 2, 1>, scalar_prefetch = 0 : i64, scratch_operands = 0 : i64, tpu.core_type = #tpu.core_type<tc>, window_params = [{transform_indices = @transform_0, window_bounds = array<i64: 1, 8, 2, 128>}, {transform_indices = @transform_1, window_bounds = array<i64: 1, 32, 128>}, {transform_indices = @transform_2, window_bounds = array<i64: 1, 8, 2, 32>}, {transform_indices = @transform_3, window_bounds = array<i64: 1, 2, 32>}, {transform_indices = @transform_4, window_bounds = array<i64: 1, 2, 32>}]} {
    %c0_i32 = arith.constant 0 : i32
    %0 = arith.cmpi eq, %arg1, %c0_i32 : i32
    %1 = arith.extui %0 : i1 to i32
    %c0_i32_0 = arith.constant 0 : i32
    %2 = arith.cmpi ne, %1, %c0_i32_0 : i32
    scf.if %2 {
      %cst = arith.constant 0.000000e+00 : f32
      %17 = vector.broadcast %cst : f32 to vector<2x32xf32>
      %c0_17 = arith.constant 0 : index
      %c0_18 = arith.constant 0 : index
      %c0_19 = arith.constant 0 : index
      %18 = vector.load %arg5[%c0_17, %c0_18, %c0_19] : memref<1x2x32xf32, #tpu.memory_space<vmem>>, vector<1x2x32xf32>
      %19 = vector.shape_cast %18 : vector<1x2x32xf32> to vector<2x32xf32>
      %20 = vector.shape_cast %17 : vector<2x32xf32> to vector<1x2x32xf32>
      tpu.vector_store %arg5[%c0_17, %c0_18, %c0_19], %20 {strides = array<i32>} : memref<1x2x32xf32, #tpu.memory_space<vmem>>, vector<1x2x32xf32>,
      %cst_20 = arith.constant 0.000000e+00 : f32
      %21 = vector.broadcast %cst_20 : f32 to vector<2x32xf32>
      %c0_21 = arith.constant 0 : index
      %c0_22 = arith.constant 0 : index
      %c0_23 = arith.constant 0 : index
      %22 = vector.load %arg6[%c0_21, %c0_22, %c0_23] : memref<1x2x32xf32, #tpu.memory_space<vmem>>, vector<1x2x32xf32>
      %23 = vector.shape_cast %22 : vector<1x2x32xf32> to vector<2x32xf32>
      %24 = vector.shape_cast %21 : vector<2x32xf32> to vector<1x2x32xf32>
      tpu.vector_store %arg6[%c0_21, %c0_22, %c0_23], %24 {strides = array<i32>} : memref<1x2x32xf32, #tpu.memory_space<vmem>>, vector<1x2x32xf32>,
    } else {
    }
    %c0 = arith.constant 0 : index
    %c0_1 = arith.constant 0 : index
    %c0_2 = arith.constant 0 : index
    %3 = vector.load %arg3[%c0, %c0_1, %c0_2] : memref<1x32x128xf32, #tpu.memory_space<vmem>>, vector<1x32x128xf32>
    %4 = vector.shape_cast %3 : vector<1x32x128xf32> to vector<32x128xf32>
    %c0_3 = arith.constant 0 : index
    %c0_4 = arith.constant 0 : index
    %c0_5 = arith.constant 0 : index
    %5 = vector.load %arg5[%c0_3, %c0_4, %c0_5] : memref<1x2x32xf32, #tpu.memory_space<vmem>>, vector<1x2x32xf32>
    %6 = vector.shape_cast %5 : vector<1x2x32xf32> to vector<2x32xf32>
    %c0_6 = arith.constant 0 : index
    %c0_7 = arith.constant 0 : index
    %c0_8 = arith.constant 0 : index
    %7 = vector.load %arg6[%c0_6, %c0_7, %c0_8] : memref<1x2x32xf32, #tpu.memory_space<vmem>>, vector<1x2x32xf32>
    %8 = vector.shape_cast %7 : vector<1x2x32xf32> to vector<2x32xf32>
    %c0_i32_9 = arith.constant 0 : i32
    %c8_i32 = arith.constant 8 : i32
    %9 = arith.addi %c0_i32_9, %c8_i32 : i32
    %c1_i32 = arith.constant 1 : i32
    %10:2 = scf.for %arg7 = %c0_i32_9 to %9 step %c1_i32 iter_args(%arg8 = %6, %arg9 = %8) -> (vector<2x32xf32>, vector<2x32xf32>)  : i32 {
      %c1_i32_17 = arith.constant 1 : i32
      %17 = arith.subi %c1_i32_17, %arg0 : i32
      %18 = arith.muli %17, %arg7 : i32
      %c7_i32 = arith.constant 7 : i32
      %19 = arith.subi %c7_i32, %arg7 : i32
      %20 = arith.muli %arg0, %19 : i32
      %21 = arith.addi %18, %20 : i32
      %c0_18 = arith.constant 0 : index
      %22 = arith.index_cast %21 : i32 to index
      %c0_19 = arith.constant 0 : index
      %c0_20 = arith.constant 0 : index
      %23 = vector.load %arg2[%c0_18, %22, %c0_19, %c0_20] : memref<1x8x2x128xf32, #tpu.memory_space<vmem>>, vector<1x1x2x128xf32>
      %24 = vector.shape_cast %23 : vector<1x1x2x128xf32> to vector<2x128xf32>
      %cst = arith.constant dense<0.000000e+00> : vector<2x128xf32>
      %25 = tpu.matmul %arg8, %4, %cst {dimension_numbers = #tpu.dot_dimension_numbers<[1], [0], [0], [1], [0, 0, 1, 1], [], []>} : vector<2x32xf32>, vector<32x128xf32>, vector<2x128xf32> -> vector<2x128xf32>
      %26 = arith.addf %24, %25 : vector<2x128xf32>
      %27 = vector.extract_strided_slice %26 {offsets = [0, 0], sizes = [2, 32], strides = [1, 1]} : vector<2x128xf32> to vector<2x32xf32>
      %28 = arith.negf %27 : vector<2x32xf32>
      %29 = math.exp %28 : vector<2x32xf32>
      %cst_21 = arith.constant 1.000000e+00 : f32
      %30 = vector.broadcast %cst_21 : f32 to vector<2x32xf32>
      %31 = arith.addf %30, %29 : vector<2x32xf32>
      %32 = arith.divf %30, %31 : vector<2x32xf32>
      %33 = vector.extract_strided_slice %26 {offsets = [0, 32], sizes = [2, 32], strides = [1, 1]} : vector<2x128xf32> to vector<2x32xf32>
      %34 = arith.negf %33 : vector<2x32xf32>
      %35 = math.exp %34 : vector<2x32xf32>
      %cst_22 = arith.constant 1.000000e+00 : f32
      %36 = vector.broadcast %cst_22 : f32 to vector<2x32xf32>
      %37 = arith.addf %36, %35 : vector<2x32xf32>
      %38 = arith.divf %36, %37 : vector<2x32xf32>
      %39 = vector.extract_strided_slice %26 {offsets = [0, 64], sizes = [2, 32], strides = [1, 1]} : vector<2x128xf32> to vector<2x32xf32>
      %40 = math.tanh %39 : vector<2x32xf32>
      %41 = vector.extract_strided_slice %26 {offsets = [0, 96], sizes = [2, 32], strides = [1, 1]} : vector<2x128xf32> to vector<2x32xf32>
      %42 = arith.negf %41 : vector<2x32xf32>
      %43 = math.exp %42 : vector<2x32xf32>
      %cst_23 = arith.constant 1.000000e+00 : f32
      %44 = vector.broadcast %cst_23 : f32 to vector<2x32xf32>
      %45 = arith.addf %44, %43 : vector<2x32xf32>
      %46 = arith.divf %44, %45 : vector<2x32xf32>
      %47 = arith.mulf %38, %arg9 : vector<2x32xf32>
      %48 = arith.mulf %32, %40 : vector<2x32xf32>
      %49 = arith.addf %47, %48 : vector<2x32xf32>
      %50 = math.tanh %49 : vector<2x32xf32>
      %51 = arith.mulf %46, %50 : vector<2x32xf32>
      %c0_24 = arith.constant 0 : index
      %52 = arith.index_cast %21 : i32 to index
      %c0_25 = arith.constant 0 : index
      %c0_26 = arith.constant 0 : index
      %53 = vector.load %arg4[%c0_24, %52, %c0_25, %c0_26] : memref<1x8x2x32xf32, #tpu.memory_space<vmem>>, vector<1x1x2x32xf32>
      %54 = vector.shape_cast %53 : vector<1x1x2x32xf32> to vector<2x32xf32>
      %55 = vector.shape_cast %51 : vector<2x32xf32> to vector<1x1x2x32xf32>
      tpu.vector_store %arg4[%c0_24, %52, %c0_25, %c0_26], %55 {strides = array<i32>} : memref<1x8x2x32xf32, #tpu.memory_space<vmem>>, vector<1x1x2x32xf32>,
      scf.yield %51, %49 : vector<2x32xf32>, vector<2x32xf32>
    }
    %c8_i32_10 = arith.constant 8 : i32
    %c0_11 = arith.constant 0 : index
    %c0_12 = arith.constant 0 : index
    %c0_13 = arith.constant 0 : index
    %11 = vector.load %arg5[%c0_11, %c0_12, %c0_13] : memref<1x2x32xf32, #tpu.memory_space<vmem>>, vector<1x2x32xf32>
    %12 = vector.shape_cast %11 : vector<1x2x32xf32> to vector<2x32xf32>
    %13 = vector.shape_cast %10#0 : vector<2x32xf32> to vector<1x2x32xf32>
    tpu.vector_store %arg5[%c0_11, %c0_12, %c0_13], %13 {strides = array<i32>} : memref<1x2x32xf32, #tpu.memory_space<vmem>>, vector<1x2x32xf32>,
    %c0_14 = arith.constant 0 : index
    %c0_15 = arith.constant 0 : index
    %c0_16 = arith.constant 0 : index
    %14 = vector.load %arg6[%c0_14, %c0_15, %c0_16] : memref<1x2x32xf32, #tpu.memory_space<vmem>>, vector<1x2x32xf32>
    %15 = vector.shape_cast %14 : vector<1x2x32xf32> to vector<2x32xf32>
    %16 = vector.shape_cast %10#1 : vector<2x32xf32> to vector<1x2x32xf32>
    tpu.vector_store %arg6[%c0_14, %c0_15, %c0_16], %16 {strides = array<i32>} : memref<1x2x32xf32, #tpu.memory_space<vmem>>, vector<1x2x32xf32>,
    return
  }
  func.func @transform_0(%arg0: i32, %arg1: i32) -> (i32, i32, i32, i32) {
    %c1_i32 = arith.constant 1 : i32
    %0 = arith.subi %c1_i32, %arg0 : i32
    %1 = arith.muli %0, %arg1 : i32
    %c0_i32 = arith.constant 0 : i32
    %2 = arith.subi %c0_i32, %arg1 : i32
    %3 = arith.muli %arg0, %2 : i32
    %4 = arith.addi %1, %3 : i32
    %c0_i32_0 = arith.constant 0 : i32
    %c0_i32_1 = arith.constant 0 : i32
    %c0_i32_2 = arith.constant 0 : i32
    return %arg0, %4, %c0_i32_0, %c0_i32_1 : i32, i32, i32, i32
  }
  func.func @transform_1(%arg0: i32, %arg1: i32) -> (i32, i32, i32) {
    %c0_i32 = arith.constant 0 : i32
    %c0_i32_0 = arith.constant 0 : i32
    %c0_i32_1 = arith.constant 0 : i32
    return %arg0, %c0_i32, %c0_i32_0 : i32, i32, i32
  }
  func.func @transform_2(%arg0: i32, %arg1: i32) -> (i32, i32, i32, i32) {
    %c1_i32 = arith.constant 1 : i32
    %0 = arith.subi %c1_i32, %arg0 : i32
    %1 = arith.muli %0, %arg1 : i32
    %c0_i32 = arith.constant 0 : i32
    %2 = arith.subi %c0_i32, %arg1 : i32
    %3 = arith.muli %arg0, %2 : i32
    %4 = arith.addi %1, %3 : i32
    %c0_i32_0 = arith.constant 0 : i32
    %c0_i32_1 = arith.constant 0 : i32
    %c0_i32_2 = arith.constant 0 : i32
    return %arg0, %4, %c0_i32_0, %c0_i32_1 : i32, i32, i32, i32
  }
  func.func @transform_3(%arg0: i32, %arg1: i32) -> (i32, i32, i32) {
    %c0_i32 = arith.constant 0 : i32
    %c0_i32_0 = arith.constant 0 : i32
    %c0_i32_1 = arith.constant 0 : i32
    return %arg0, %c0_i32, %c0_i32_0 : i32, i32, i32
  }
  func.func @transform_4(%arg0: i32, %arg1: i32) -> (i32, i32, i32) {
    %c0_i32 = arith.constant 0 : i32
    %c0_i32_0 = arith.constant 0 : i32
    %c0_i32_1 = arith.constant 0 : i32
    return %arg0, %c0_i32, %c0_i32_0 : i32, i32, i32
  }
}

</mosaic_0001>

<llo_original>
// kernel: tpu_custom_call.1
$region0: #{tpu_custom_call.1}
  #allocation0 [shape = 'u32[]', space=smem, size = 0x4, offset = 0x4, fixed_abs, tag = 'smem constant byte address 0x4 - core index']
  #allocation1 [shape = 'u32[144,128]{1,0:T(1,128)}', space=vmem, size = 0x12000, scoped, tag = 'internal scratch']
  %s0 = inlined_call_operand.hbm [shape: f32[2,8,2,128], index: 0, kind: input, shape index: {}]
  %s1 = inlined_call_operand.hbm [shape: f32[2,32,128], index: 1, kind: input, shape index: {}]
  %s2 = inlined_call_operand.hbm [shape: f32[2,8,2,32], index: 2, kind: output, shape index: {0}]
  %s3 = inlined_call_operand.hbm [shape: f32[2,2,32], index: 3, kind: output, shape index: {1}]
  %s4 = inlined_call_operand.hbm [shape: f32[2,2,32], index: 4, kind: output, shape index: {2}]
  %5 = xla_tuple %s2, %s3, %s4
  %s6 = sld [smem:[#allocation0]]
  $region76: #{tpu_custom_call.1} parent=0
    _
  %s8 = ssub.s32 1, %s6
  %s9 = scalar_select 0, %s8, %s6
  $region1: #{tpu_custom_call.1} parent=0
    #allocation2 [shape = 'u8[16384]{0}', space=vmem, size = 0x4000, scoped, tag = 'input window, operand 0']
    #allocation3 [shape = 's32[2]{0}', space=sflag, size = 0x8, scoped, tag = 'scoped memory for tpu_custom_call.1']
    #allocation4 [shape = 's32[2]{0}', space=sflag, size = 0x8, scoped, tag = 'scoped memory for tpu_custom_call.1']
    #allocation5 [shape = 'u8[32768]{0}', space=vmem, size = 0x8000, scoped, tag = 'input window, operand 1']
    #allocation6 [shape = 's32[2]{0}', space=sflag, size = 0x8, scoped, tag = 'scoped memory for tpu_custom_call.1']
    #allocation7 [shape = 'u8[16384]{0}', space=vmem, size = 0x4000, scoped, tag = 'output window, operand 0']
    #allocation8 [shape = 'u8[2048]{0}', space=vmem, size = 0x800, scoped, tag = 'output window, operand 1']
    #allocation9 [shape = 's32[2]{0}', space=sflag, size = 0x8, scoped, tag = 'scoped memory for tpu_custom_call.1']
    #allocation10 [shape = 'u8[2048]{0}', space=vmem, size = 0x800, scoped, tag = 'output window, operand 2']
    %10 = vsyncpa [#allocation3], 0
    %s11 = scalar_lea.sflag [#allocation3], 1
    %12 = vsyncpa %s11, 0
    %13 = vsyncpa [#allocation6], 0
    %s14 = scalar_lea.sflag [#allocation6], 1
    %15 = vsyncpa %s14, 0
    %16 = vsyncpa [#allocation4], 0
    %s17 = scalar_lea.sflag [#allocation4], 1
    %18 = vsyncpa %s17, 0
    %19 = vsyncpa [#allocation9], 0
    %s20 = scalar_lea.sflag [#allocation9], 1
    %21 = vsyncpa %s20, 0
    loop: start=0, step=1, limit=4
    $region2: #{tpu_custom_call.1} parent=1 // loop_pre_header
      _
    $region3: #{tpu_custom_call.1} parent=1 // loop_header
      %s23 = sphi 0, %s27
      %p24 = scmp.ge.s32.totalorder %s23, 4
      %s30 = sphi 0, %s42
      %s31 = sphi 0, %s38
      %s32 = sphi 0, %s30
      %s33 = sphi 0, %s31
      %s34 = sphi 0, %s32
      %s35 = sphi 0, %s33
      %s57 = sphi 0, %s59
      %s60 = sphi 0, %s57
      %s61 = sphi 0, %s60
      %s77 = sphi 0, %s61
      %s83 = sphi 0, %s85
      %s86 = sphi 0, %s83
      %s87 = sphi 0, %s86
      %s103 = sphi 0, %s87
      %s121 = sphi 0, %s123
      %s124 = sphi 0, %s121
      %s125 = sphi 0, %s124
      %s141 = sphi 0, %s125
      %s147 = sphi 0, %s149
      %s150 = sphi 0, %s147
      %s151 = sphi 0, %s150
      %s167 = sphi 0, %s151
      %s173 = sphi 0, %s175
      %s176 = sphi 0, %s173
      %s177 = sphi 0, %s176
      %s193 = sphi 0, %s177
    $region4: #{tpu_custom_call.1} parent=1 // loop_header_branch
      %26 = sbr.rel (%p24) target = $region8
    $region5: #{tpu_custom_call.1} parent=1 // loop_body
      %s28 = ssub.s32 %s23, 1
      %s29 = ssub.s32 %s23, 2
      %s36 = sadd.s32 1, %s31
      %p37 = scmp.ge.s32.totalorder %s36, 1
      %s38 = scalar_select %p37, 0, %s36
      %s39 = sadd.s32 1, %s30
      %s40 = scalar_select %p37, %s39, %s30
      %p41 = scmp.ge.s32.totalorder %s40, 2
      %s42 = scalar_select %p41, 0, %s40
      %s43 = ssub.s32 1, %s30
      %s44 = smul.u32 %s43, %s31
      %s45 = ssub.s32 0, %s31
      %s46 = smul.u32 %s30, %s45
      %s47 = sadd.s32 %s44, %s46
      %s48 = ssub.s32 1, %s42
      %s49 = smul.u32 %s48, %s38
      %s50 = ssub.s32 0, %s38
      %s51 = smul.u32 %s42, %s50
      %s52 = sadd.s32 %s49, %s51
      %s53 = ssub.s32 %s30, %s42
      %s54 = ssub.s32 %s47, %s52
      %s55 = sor.u32 %s53, %s54
      %p56 = scmp.eq.s32.totalorder %s55, 0
      %s58 = sadd.s32 %s57, 1
      %s59 = scalar_select %p56, %s57, %s58
      %p62 = pneg %p56
      %p63 = scmp.eq.s32.totalorder %s23, 1
      %p64 = por %p62, %p63
      %p65 = scmp.ne.s32.totalorder %s57, %s60
      %p66 = scmp.eq.s32.totalorder %s23, 0
      %p67 = por %p65, %p66
      %p68 = scmp.ne.s32.totalorder %s57, %s60
      %p69 = scmp.eq.s32.totalorder %s28, 1
      %p70 = por %p68, %p69
      %p71 = scmp.ne.s32.totalorder %s60, %s61
      %p72 = scmp.eq.s32.totalorder %s28, 0
      %p73 = por %p71, %p72
      %p74 = scmp.ne.s32.totalorder %s60, %s61
      %p75 = scmp.eq.s32.totalorder %s29, 1
      %p76 = por %p74, %p75
      %p78 = scmp.ne.s32.totalorder %s61, %s77
      %p79 = scmp.eq.s32.totalorder %s29, 0
      %p80 = por %p78, %p79
      %s81 = ssub.s32 %s30, %s42
      %p82 = scmp.eq.s32.totalorder %s81, 0
      %s84 = sadd.s32 %s83, 1
      %s85 = scalar_select %p82, %s83, %s84
      %p88 = pneg %p82
      %p89 = scmp.eq.s32.totalorder %s23, 1
      %p90 = por %p88, %p89
      %p91 = scmp.ne.s32.totalorder %s83, %s86
      %p92 = scmp.eq.s32.totalorder %s23, 0
      %p93 = por %p91, %p92
      %p94 = scmp.ne.s32.totalorder %s83, %s86
      %p95 = scmp.eq.s32.totalorder %s28, 1
      %p96 = por %p94, %p95
      %p97 = scmp.ne.s32.totalorder %s86, %s87
      %p98 = scmp.eq.s32.totalorder %s28, 0
      %p99 = por %p97, %p98
      %p100 = scmp.ne.s32.totalorder %s86, %s87
      %p101 = scmp.eq.s32.totalorder %s29, 1
      %p102 = por %p100, %p101
      %p104 = scmp.ne.s32.totalorder %s87, %s103
      %p105 = scmp.eq.s32.totalorder %s29, 0
      %p106 = por %p104, %p105
      %s107 = ssub.s32 1, %s30
      %s108 = smul.u32 %s107, %s31
      %s109 = ssub.s32 0, %s31
      %s110 = smul.u32 %s30, %s109
      %s111 = sadd.s32 %s108, %s110
      %s112 = ssub.s32 1, %s42
      %s113 = smul.u32 %s112, %s38
      %s114 = ssub.s32 0, %s38
      %s115 = smul.u32 %s42, %s114
      %s116 = sadd.s32 %s113, %s115
      %s117 = ssub.s32 %s30, %s42
      %s118 = ssub.s32 %s111, %s116
      %s119 = sor.u32 %s117, %s118
      %p120 = scmp.eq.s32.totalorder %s119, 0
      %s122 = sadd.s32 %s121, 1
      %s123 = scalar_select %p120, %s121, %s122
      %p126 = pneg %p120
      %p127 = scmp.eq.s32.totalorder %s23, 1
      %p128 = por %p126, %p127
      %p129 = scmp.ne.s32.totalorder %s121, %s124
      %p130 = scmp.eq.s32.totalorder %s23, 0
      %p131 = por %p129, %p130
      %p132 = scmp.ne.s32.totalorder %s121, %s124
      %p133 = scmp.eq.s32.totalorder %s28, 1
      %p134 = por %p132, %p133
      %p135 = scmp.ne.s32.totalorder %s124, %s125
      %p136 = scmp.eq.s32.totalorder %s28, 0
      %p137 = por %p135, %p136
      %p138 = scmp.ne.s32.totalorder %s124, %s125
      %p139 = scmp.eq.s32.totalorder %s29, 1
      %p140 = por %p138, %p139
      %p142 = scmp.ne.s32.totalorder %s125, %s141
      %p143 = scmp.eq.s32.totalorder %s29, 0
      %p144 = por %p142, %p143
      %s145 = ssub.s32 %s30, %s42
      %p146 = scmp.eq.s32.totalorder %s145, 0
      %s148 = sadd.s32 %s147, 1
      %s149 = scalar_select %p146, %s147, %s148
      %p152 = pneg %p146
      %p153 = scmp.eq.s32.totalorder %s23, 1
      %p154 = por %p152, %p153
      %p155 = scmp.ne.s32.totalorder %s147, %s150
      %p156 = scmp.eq.s32.totalorder %s23, 0
      %p157 = por %p155, %p156
      %p158 = scmp.ne.s32.totalorder %s147, %s150
      %p159 = scmp.eq.s32.totalorder %s28, 1
      %p160 = por %p158, %p159
      %p161 = scmp.ne.s32.totalorder %s150, %s151
      %p162 = scmp.eq.s32.totalorder %s28, 0
      %p163 = por %p161, %p162
      %p164 = scmp.ne.s32.totalorder %s150, %s151
      %p165 = scmp.eq.s32.totalorder %s29, 1
      %p166 = por %p164, %p165
      %p168 = scmp.ne.s32.totalorder %s151, %s167
      %p169 = scmp.eq.s32.totalorder %s29, 0
      %p170 = por %p168, %p169
      %s171 = ssub.s32 %s30, %s42
      %p172 = scmp.eq.s32.totalorder %s171, 0
      %s174 = sadd.s32 %s173, 1
      %s175 = scalar_select %p172, %s173, %s174
      %p178 = pneg %p172
      %p179 = scmp.eq.s32.totalorder %s23, 1
      %p180 = por %p178, %p179
      %p181 = scmp.ne.s32.totalorder %s173, %s176
      %p182 = scmp.eq.s32.totalorder %s23, 0
      %p183 = por %p181, %p182
      %p184 = scmp.ne.s32.totalorder %s173, %s176
      %p185 = scmp.eq.s32.totalorder %s28, 1
      %p186 = por %p184, %p185
      %p187 = scmp.ne.s32.totalorder %s176, %s177
      %p188 = scmp.eq.s32.totalorder %s28, 0
      %p189 = por %p187, %p188
      %p190 = scmp.ne.s32.totalorder %s176, %s177
      %p191 = scmp.eq.s32.totalorder %s29, 1
      %p192 = por %p190, %p191
      %p194 = scmp.ne.s32.totalorder %s177, %s193
      %p195 = scmp.eq.s32.totalorder %s29, 0
      %p196 = por %p194, %p195
      %p197 = scmp.le.s32.totalorder 1, %s23
      %p198 = scmp.lt.s32.totalorder %s23, 3
      %p199 = pnand %p197, %p198
      %p200 = pneg %p199
      // Predicated region
      $region9: #{tpu_custom_call.1} parent=5 // pred_check
        _
      $region10: #{tpu_custom_call.1} parent=5 // pred_check_branch
        %202 = sbr.rel (%p199) target = $region12
      $region11: #{tpu_custom_call.1} parent=5 // pred_region
        %s203 = ssub.s32 %s23, 1
      $region12: #{tpu_custom_call.1} parent=5 // pred_fallthru
        _
      %p204 = scmp.lt.s32.totalorder %s23, 2
      // Predicated region
      $region13: #{tpu_custom_call.1} parent=5 // pred_check
        %p205 = pneg %p204
      $region14: #{tpu_custom_call.1} parent=5 // pred_check_branch
        %207 = sbr.rel (%p205) target = $region16
      $region15: #{tpu_custom_call.1} parent=5 // pred_region
        // Predicated region
        $region17: #{tpu_custom_call.1} parent=15 // pred_check
          %p208 = pneg %p67
        $region18: #{tpu_custom_call.1} parent=15 // pred_check_branch
          %210 = sbr.rel (%p208) target = $region20
        $region19: #{tpu_custom_call.1} parent=15 // pred_region
          %s211 = sand.u32 %s57, 1
          %s212 = scalar_lea.sflag [#allocation3], %s211
          %s213 = sand.u32 %s57, 1
          %s214 = smul.addr %s213, 16
          %s215 = scalar_lea.vmem [#allocation2], %s214
          %s216 = ssub.s32 1, %s30
          %s217 = smul.u32 %s216, %s31
          %s218 = ssub.s32 0, %s31
          %s219 = smul.u32 %s30, %s218
          %s220 = sadd.s32 %s217, %s219
          %s221 = smul.u32 8, %s220
          %s223 = ssub.s32 256, 256
          %224 = vsyncadd %s212, %s223
          %s225 = smul.addr %s30, 8
          %s226 = sadd.s32 %s221, %s225
          %s227 = smul.addr %s226, 32
          %s228 = scalar_lea.hbm %s0, %s227
          %s229 = sshll.u32 %s215, 4
          %s230 = int_to_ptr.vmem [resolvable:$true] %s229
          %235 = dma.hbm_to_vmem [thread:$0]  %s228, 256, %s230, %s212, 32, 32, 2
        $region20: #{tpu_custom_call.1} parent=15 // pred_fallthru
          _
        // Predicated region
        $region21: #{tpu_custom_call.1} parent=15 // pred_check
          %p236 = pneg %p93
        $region22: #{tpu_custom_call.1} parent=15 // pred_check_branch
          %238 = sbr.rel (%p236) target = $region24
        $region23: #{tpu_custom_call.1} parent=15 // pred_region
          %s239 = sand.u32 %s83, 1
          %s240 = scalar_lea.sflag [#allocation6], %s239
          %s241 = sand.u32 %s83, 1
          %s242 = smul.addr %s241, 32
          %s243 = scalar_lea.vmem [#allocation5], %s242
          %s245 = ssub.s32 512, 512
          %246 = vsyncadd %s240, %s245
          %s247 = smul.addr %s30, 4
          %s248 = smul.addr %s247, 128
          %s249 = scalar_lea.hbm %s1, %s248
          %s250 = sshll.u32 %s243, 4
          %s251 = int_to_ptr.vmem [resolvable:$true] %s250
          %256 = dma.hbm_to_vmem [thread:$0]  %s249, 512, %s251, %s240, 128, 128, 8
        $region24: #{tpu_custom_call.1} parent=15 // pred_fallthru
          _
      $region16: #{tpu_custom_call.1} parent=5 // pred_fallthru
        _
      %p257 = scmp.le.s32.totalorder 1, %s23
      %p258 = scmp.lt.s32.totalorder %s23, 3
      %p259 = pnand %p257, %p258
      %p260 = pneg %p259
      // Predicated region
      $region25: #{tpu_custom_call.1} parent=5 // pred_check
        _
      $region26: #{tpu_custom_call.1} parent=5 // pred_check_branch
        %262 = sbr.rel (%p259) target = $region28
      $region27: #{tpu_custom_call.1} parent=5 // pred_region
        %s263 = ssub.s32 %s23, 1
        %s264 = sand.u32 %s60, 1
        %s265 = scalar_lea.sflag [#allocation3], %s264
        %s266 = sand.u32 %s60, 1
        %s267 = smul.addr %s266, 16
        %s268 = scalar_lea.vmem [#allocation2], %s267
        // Predicated region
        $region29: #{tpu_custom_call.1} parent=27 // pred_check
          %p269 = pneg %p73
        $region30: #{tpu_custom_call.1} parent=27 // pred_check_branch
          %271 = sbr.rel (%p269) target = $region32
        $region31: #{tpu_custom_call.1} parent=27 // pred_region
          %272 = dma.done %s265, 256
        $region32: #{tpu_custom_call.1} parent=27 // pred_fallthru
          _
        %s273 = sand.u32 %s86, 1
        %s274 = scalar_lea.sflag [#allocation6], %s273
        %s275 = sand.u32 %s86, 1
        %s276 = smul.addr %s275, 32
        %s277 = scalar_lea.vmem [#allocation5], %s276
        // Predicated region
        $region33: #{tpu_custom_call.1} parent=27 // pred_check
          %p278 = pneg %p99
        $region34: #{tpu_custom_call.1} parent=27 // pred_check_branch
          %280 = sbr.rel (%p278) target = $region36
        $region35: #{tpu_custom_call.1} parent=27 // pred_region
          %281 = dma.done %s274, 512
        $region36: #{tpu_custom_call.1} parent=27 // pred_fallthru
          _
        %s282 = sand.u32 %s60, 1
        %s283 = scalar_lea.sflag [#allocation3], %s282
        %s284 = sand.u32 %s60, 1
        %s285 = smul.addr %s284, 16
        %s286 = scalar_lea.vmem [#allocation2], %s285
        %p287 = pneg %p73
        %p288 = pneg %p70
        %s289 = sand.u32 %s86, 1
        %s290 = scalar_lea.sflag [#allocation6], %s289
        %s291 = sand.u32 %s86, 1
        %s292 = smul.addr %s291, 32
        %s293 = scalar_lea.vmem [#allocation5], %s292
        %p294 = pneg %p99
        %p295 = pneg %p96
        %p296 = pneg %p137
        %p297 = pneg %p134
        %s298 = sand.u32 %s124, 1
        %s299 = scalar_lea.sflag [#allocation4], %s298
        %s300 = sand.u32 %s124, 1
        %s301 = smul.addr %s300, 16
        %s302 = scalar_lea.vmem [#allocation7], %s301
        %p303 = pneg %p163
        %p304 = pneg %p160
        %s305 = sand.u32 %s28, 1
        %s306 = scalar_lea.sflag [#allocation9], %s305
        %s307 = sand.u32 %s150, 1
        %s308 = smul.addr %s307, 2
        %s309 = scalar_lea.vmem [#allocation8], %s308
        %p310 = pneg %p189
        %p311 = pneg %p186
        %s312 = sand.u32 %s28, 1
        %s313 = scalar_lea.sflag [#allocation9], %s312
        %s314 = sand.u32 %s176, 1
        %s315 = smul.addr %s314, 2
        %s316 = scalar_lea.vmem [#allocation10], %s315
        %s317 = ssub.s32 1, %s32
        %s318 = smul.u32 %s317, %s33
        %s319 = ssub.s32 0, %s33
        %s320 = smul.u32 %s32, %s319
        %s321 = sadd.s32 %s318, %s320
        %s322 = smul.u32 8, %s321
        %s323 = ssub.s32 1, %s32
        %s324 = smul.u32 %s323, %s33
        %s325 = ssub.s32 0, %s33
        %s326 = smul.u32 %s32, %s325
        %s327 = sadd.s32 %s324, %s326
        %s328 = smul.u32 8, %s327
        %p329 = scmp.eq.s32.totalorder %s33, 0
        // Predicated region
        $region37: #{tpu_custom_call.1} parent=27 // pred_check
          %p330 = pneg %p329
        $region38: #{tpu_custom_call.1} parent=27 // pred_check_branch
          %332 = sbr.rel (%p330) target = $region40
        $region39: #{tpu_custom_call.1} parent=27 // pred_region
          %vm333 = vcmask 254976
          %334 = vst.msk [vmem:[%s309] sm:$0x3] %vm333, 0.0
          %335 = vst.msk [vmem:[%s316] sm:$0x3] %vm333, 0.0
        $region40: #{tpu_custom_call.1} parent=27 // pred_fallthru
          _
        %v336 = vld [vmem:[%s277] sm:$0xff]
        %v337 = vld [vmem:[%s277 + $0x8] sm:$0xff]
        %v338 = vld [vmem:[%s277 + $0x10] sm:$0xff]
        %v339 = vld [vmem:[%s277 + $0x18] sm:$0xff]
        %v340 = vld [vmem:[%s309] sm:$0x3]
        %v341 = vld [vmem:[%s316] sm:$0x3]
        loop: start=0, step=1, limit=8
        $region41: #{tpu_custom_call.1} parent=27 // loop_pre_header
          _
        $region42: #{tpu_custom_call.1} parent=27 // loop_header
          %s343 = sphi 0, %s347
          %p344 = scmp.ge.s32.totalorder %s343, 8
          %v348 = vphi %v340, %v463
          %v349 = vphi %v341, %v470
        $region43: #{tpu_custom_call.1} parent=27 // loop_header_branch
          %346 = sbr.rel (%p344) target = $region47
        $region44: #{tpu_custom_call.1} parent=27 // loop_body
          %s350 = ssub.s32 1, %s32
          %s351 = smul.u32 %s350, %s343
          %s352 = ssub.s32 7, %s343
          %s353 = smul.u32 %s32, %s352
          %s354 = sadd.s32 %s351, %s353
          %s355 = smul.u32 %s354, 2
          %s356 = scalar_lea.vmem %s268, %s355 [#allocation2]
          %v357 = vld [vmem:[%s356] sm:$0x3]
          %vm358 = vcmask 261120
          %v360 = vsel %vm358, %v348, 0
          %362 = vmatprep.subr.mxu0 0.0
          %363 = vmatpush1.msra.mxu0 %v336
          %364 = vmatprep.subr.mxu0 0.0
          %365 = vmatpush1.msra.mxu0 %v337
          %366 = vmatprep.subr.mxu0 0.0
          %367 = vmatpush1.msra.mxu0 %v338
          %368 = vmatprep.subr.mxu0 0.0
          %369 = vmatpush1.msra.mxu0 %v339
          %370 = vmatprep.subr.mxu0 0.0
          %371 = vmatpush1.msra.mxu0 0.0
          %372 = vmatprep.subr.mxu0 0.0
          %373 = vmatpush1.msra.mxu0 0.0
          %374 = vmatprep.subr.mxu0 0.0
          %375 = vmatpush1.msra.mxu0 0.0
          %376 = vmatprep.subr.mxu0 0.0
          %377 = vmatpush1.msra.mxu0 0.0
          %378 = vmatprep.subr.mxu0 0.0
          %379 = vmatpush1.msra.mxu0 0.0
          %380 = vmatprep.subr.mxu0 0.0
          %381 = vmatpush1.msra.mxu0 0.0
          %382 = vmatprep.subr.mxu0 0.0
          %383 = vmatpush1.msra.mxu0 0.0
          %384 = vmatprep.subr.mxu0 0.0
          %385 = vmatpush1.msra.mxu0 0.0
          %386 = vmatprep.subr.mxu0 0.0
          %387 = vmatpush1.msra.mxu0 0.0
          %388 = vmatprep.subr.mxu0 0.0
          %389 = vmatpush1.msra.mxu0 0.0
          %390 = vmatprep.subr.mxu0 0.0
          %391 = vmatpush1.msra.mxu0 0.0
          %392 = vmatprep.subr.mxu0 0.0
          %393 = vmatpush1.msra.mxu0 0.0
          %394 = vmatprep.subr.mxu0 0.0
          %395 = vmatpush1.msra.mxu0 0.0
          %396 = vmatprep.subr.mxu0 0.0
          %397 = vmatpush1.msra.mxu0 0.0
          %398 = vmatprep.subr.mxu0 0.0
          %399 = vmatpush1.msra.mxu0 0.0
          %400 = vmatprep.subr.mxu0 0.0
          %401 = vmatpush1.msra.mxu0 0.0
          %402 = vmatprep.subr.mxu0 0.0
          %403 = vmatpush1.msra.mxu0 0.0
          %404 = vmatprep.subr.mxu0 0.0
          %405 = vmatpush1.msra.mxu0 0.0
          %406 = vmatprep.subr.mxu0 0.0
          %407 = vmatpush1.msra.mxu0 0.0
          %408 = vmatprep.subr.mxu0 0.0
          %409 = vmatpush1.msra.mxu0 0.0
          %410 = vmatprep.subr.mxu0 0.0
          %411 = vmatpush1.msra.mxu0 0.0
          %412 = vmatprep.subr.mxu0 0.0
          %413 = vmatpush1.msra.mxu0 0.0
          %414 = vmatprep.subr.mxu0 0.0
          %415 = vmatpush1.msra.mxu0 0.0
          %416 = vmatprep.subr.mxu0 0.0
          %417 = vmatpush1.msra.mxu0 0.0
          %418 = vmatprep.subr.mxu0 0.0
          %419 = vmatpush1.msra.mxu0 0.0
          %420 = vmatprep.subr.mxu0 0.0
          %421 = vmatpush1.msra.mxu0 0.0
          %422 = vmatprep.subr.mxu0 0.0
          %423 = vmatpush1.msra.mxu0 0.0
          %424 = vmatprep.subr.mxu0 0.0
          %425 = vmatpush1.msra.mxu0 0.0
          %426 = vmatprep.mubr.f32.mxu0 0.0
          %427 = vmatmul.mubr.f32.gmra.mrb[0].mxu0 %v360
          %v428 = vpop.f32.mrb[0].mxu0
          %v429 = vadd.f32 0.0, %v428
          %v430 = vpop.f32.mrb[0].mxu0
          %431 = vdwg.mxu0
          %v432 = vadd.f32 %v357, %v429
          %v433 = vxor.u32 %v432, 2147483648
          %v434 = vmul.f32 %v433, 1.442695
          %v435 = vpow.pop %v434
          %v436 = vadd.f32 %v435, 1.0
          %v437 = vrcp.pop %v436
          %v438 = vmul.f32 1.0, %v437
          %v439 = vtanh.pop %v432
          %441 = vrot.lane.b32.xlu0 %v349, 32
          %v442 = vpop.permute.xlu0 %441
          %v444 = vmul.f32 %v438, %v442
          %446 = vrot.lane.b32.xlu0 %v439, 64
          %v447 = vpop.permute.xlu0 %446
          %v449 = vmul.f32 %v438, %v447
          %451 = vrot.lane.b32.xlu0 %v449, 32
          %v452 = vpop.permute.xlu0 %451
          %v454 = vadd.f32 %v444, %v452
          %v455 = vtanh.pop %v454
          %457 = vrot.lane.b32.xlu0 %v455, 64
          %v458 = vpop.permute.xlu0 %457
          %v460 = vmul.f32 %v438, %v458
          %462 = vrot.lane.b32.xlu0 %v460, 32
          %v463 = vpop.permute.xlu0 %462
          %s465 = scalar_lea.vmem %s302, %s355 [#allocation7]
          %vm466 = vcmask 254976
          %467 = vst.msk [vmem:[%s465] sm:$0x3] %vm466, %v463
          %469 = vrot.lane.b32.xlu0 %v454, 96
          %v470 = vpop.permute.xlu0 %469
        $region45: #{tpu_custom_call.1} parent=27 // loop_footer
          %s347 = sadd.s32 1, %s343
        $region46: #{tpu_custom_call.1} parent=27 // loop_footer_branch
          %342 = sbr.rel target = $region42
        $region47: #{tpu_custom_call.1} parent=27 // loop_exit
          _
        %vm472 = vcmask 254976
        %473 = vst.msk [vmem:[%s309] sm:$0x3] %vm472, %v348
        %474 = vst.msk [vmem:[%s316] sm:$0x3] %vm472, %v349
        %s475 = sand.u32 %s124, 1
        %s476 = scalar_lea.sflag [#allocation4], %s475
        %s477 = sand.u32 %s124, 1
        %s478 = smul.addr %s477, 16
        %s479 = scalar_lea.vmem [#allocation7], %s478
        %s480 = sand.u32 %s28, 1
        %s481 = scalar_lea.sflag [#allocation9], %s480
        %s482 = sand.u32 %s150, 1
        %s483 = smul.addr %s482, 2
        %s484 = scalar_lea.vmem [#allocation8], %s483
        %s485 = sand.u32 %s28, 1
        %s486 = scalar_lea.sflag [#allocation9], %s485
        %s487 = sand.u32 %s176, 1
        %s488 = smul.addr %s487, 2
        %s489 = scalar_lea.vmem [#allocation10], %s488
        // Predicated region
        $region48: #{tpu_custom_call.1} parent=27 // pred_check
          %p490 = pneg %p134
        $region49: #{tpu_custom_call.1} parent=27 // pred_check_branch
          %492 = sbr.rel (%p490) target = $region51
        $region50: #{tpu_custom_call.1} parent=27 // pred_region
          %s493 = ssub.s32 1, %s32
          %s494 = smul.u32 %s493, %s33
          %s495 = ssub.s32 0, %s33
          %s496 = smul.u32 %s32, %s495
          %s497 = sadd.s32 %s494, %s496
          %s498 = smul.u32 8, %s497
          %s500 = ssub.s32 256, 256
          %501 = vsyncadd %s476, %s500
          %s502 = smul.addr %s32, 8
          %s503 = sadd.s32 %s498, %s502
          %s504 = smul.addr %s503, 32
          %s505 = scalar_lea.hbm %s2, %s504
          %s506 = sshll.u32 %s479, 4
          %s507 = int_to_ptr.vmem [resolvable:$true] %s506
          %512 = dma.vmem_to_hbm [thread:$0]  %s507, 256, %s505, %s476, 32, 32, 2
        $region51: #{tpu_custom_call.1} parent=27 // pred_fallthru
          _
        // Predicated region
        $region52: #{tpu_custom_call.1} parent=27 // pred_check
          %p513 = pneg %p160
        $region53: #{tpu_custom_call.1} parent=27 // pred_check_branch
          %515 = sbr.rel (%p513) target = $region55
        $region54: #{tpu_custom_call.1} parent=27 // pred_region
          %s517 = ssub.s32 32, 32
          %518 = vsyncadd %s481, %s517
          %s519 = smul.addr %s32, 32
          %s520 = scalar_lea.hbm %s3, %s519
          %s522 = sshll.u32 %s484, 4
          %s523 = int_to_ptr.vmem [resolvable:$true] %s522
          %525 = dma.vmem_to_hbm [thread:$0]  %s523, 32, %s520, %s481
        $region55: #{tpu_custom_call.1} parent=27 // pred_fallthru
          _
        // Predicated region
        $region56: #{tpu_custom_call.1} parent=27 // pred_check
          %p526 = pneg %p186
        $region57: #{tpu_custom_call.1} parent=27 // pred_check_branch
          %528 = sbr.rel (%p526) target = $region59
        $region58: #{tpu_custom_call.1} parent=27 // pred_region
          %s530 = ssub.s32 32, 32
          %531 = vsyncadd %s486, %s530
          %s532 = smul.addr %s32, 32
          %s533 = scalar_lea.hbm %s4, %s532
          %s535 = sshll.u32 %s489, 4
          %s536 = int_to_ptr.vmem [resolvable:$true] %s535
          %538 = dma.vmem_to_hbm [thread:$0]  %s536, 32, %s533, %s486
        $region59: #{tpu_custom_call.1} parent=27 // pred_fallthru
          _
      $region28: #{tpu_custom_call.1} parent=5 // pred_fallthru
        _
      %p539 = scmp.le.s32.totalorder 2, %s23
      // Predicated region
      $region60: #{tpu_custom_call.1} parent=5 // pred_check
        %p540 = pneg %p539
      $region61: #{tpu_custom_call.1} parent=5 // pred_check_branch
        %542 = sbr.rel (%p540) target = $region63
      $region62: #{tpu_custom_call.1} parent=5 // pred_region
        %s543 = ssub.s32 %s23, 2
        // Predicated region
        $region64: #{tpu_custom_call.1} parent=62 // pred_check
          %p544 = pneg %p140
        $region65: #{tpu_custom_call.1} parent=62 // pred_check_branch
          %546 = sbr.rel (%p544) target = $region67
        $region66: #{tpu_custom_call.1} parent=62 // pred_region
          %s547 = sand.u32 %s125, 1
          %s548 = scalar_lea.sflag [#allocation4], %s547
          %s549 = sand.u32 %s125, 1
          %s550 = smul.addr %s549, 16
          %s551 = scalar_lea.vmem [#allocation7], %s550
          %552 = dma.done %s548, 256
        $region67: #{tpu_custom_call.1} parent=62 // pred_fallthru
          _
        // Predicated region
        $region68: #{tpu_custom_call.1} parent=62 // pred_check
          %p553 = pneg %p166
        $region69: #{tpu_custom_call.1} parent=62 // pred_check_branch
          %555 = sbr.rel (%p553) target = $region71
        $region70: #{tpu_custom_call.1} parent=62 // pred_region
          %s556 = sand.u32 %s29, 1
          %s557 = scalar_lea.sflag [#allocation9], %s556
          %s558 = sand.u32 %s151, 1
          %s559 = smul.addr %s558, 2
          %s560 = scalar_lea.vmem [#allocation8], %s559
          %561 = dma.done %s557, 32
        $region71: #{tpu_custom_call.1} parent=62 // pred_fallthru
          _
        // Predicated region
        $region72: #{tpu_custom_call.1} parent=62 // pred_check
          %p562 = pneg %p192
        $region73: #{tpu_custom_call.1} parent=62 // pred_check_branch
          %564 = sbr.rel (%p562) target = $region75
        $region74: #{tpu_custom_call.1} parent=62 // pred_region
          %s565 = sand.u32 %s29, 1
          %s566 = scalar_lea.sflag [#allocation9], %s565
          %s567 = sand.u32 %s177, 1
          %s568 = smul.addr %s567, 2
          %s569 = scalar_lea.vmem [#allocation10], %s568
          %570 = dma.done %s566, 32
        $region75: #{tpu_custom_call.1} parent=62 // pred_fallthru
          _
      $region63: #{tpu_custom_call.1} parent=5 // pred_fallthru
        _
    $region6: #{tpu_custom_call.1} parent=1 // loop_footer
      %s27 = sadd.s32 1, %s23
    $region7: #{tpu_custom_call.1} parent=1 // loop_footer_branch
      %22 = sbr.rel target = $region3
    $region8: #{tpu_custom_call.1} parent=1 // loop_exit
      _
    %571 = vsyncpa [#allocation3], 1
    %s572 = scalar_lea.sflag [#allocation3], 1
    %573 = vsyncpa %s572, 1
    %574 = vsyncpa [#allocation6], 1
    %s575 = scalar_lea.sflag [#allocation6], 1
    %576 = vsyncpa %s575, 1
    %577 = vsyncpa [#allocation4], 1
    %s578 = scalar_lea.sflag [#allocation4], 1
    %579 = vsyncpa %s578, 1
    %580 = vsyncpa [#allocation9], 1
    %s581 = scalar_lea.sflag [#allocation9], 1
    %582 = vsyncpa %s581, 1

</llo_original>
